<compile_context>
chip_gen: v7x
topology: tpu7x:2x2x1
jax: 0.10.0
libtpu: 0.0.40
codegen_flags: <defaults>
</compile_context>

<pallas_src>
import jax
import jax.numpy as jnp
from jax.experimental import pallas as pl
from jax.experimental.pallas import tpu as pltpu
from collections import OrderedDict
import numpy as np


def class_proto_kernel(s_ref, o_ref):
    """ClassProto forward (no MLPs) for a batch of classes.

    s_ref: (CB, N, D) VMEM tile holding CB classes' support embeddings
    o_ref: (CB, 2, D) VMEM tile: row 0 = mean(first half), row 1 = mean(second half)
    """
    s = s_ref[...].astype(jnp.float32)              # f32 accumulation (safe for bf16 inputs)
    n_shot = s.shape[1] // 2
    inv = jnp.float32(1.0 / n_shot)                 # compile-time constant scale
    pos = jnp.sum(s[:, :n_shot, :], axis=1) * inv           # (CB, D) sublane reduction (XLU)
    neg = jnp.sum(s[:, n_shot:2 * n_shot, :], axis=1) * inv  # (CB, D)
    # Disjoint-row writes: no lane-axis concatenate / cross-lane shuffles in-kernel.
    o_ref[:, 0, :] = pos.astype(o_ref.dtype)
    o_ref[:, 1, :] = neg.astype(o_ref.dtype)


def _choose_class_block(C, N, D, itemsize=4):
    """Classes-per-block: as large as possible under a conservative VMEM budget
    (fits v5e 16 MiB / v7x 32 MiB scoped defaults with headroom, double-buffered),
    while keeping >= 2 grid blocks when possible so both v7x TensorCores get work."""
    vmem_budget = 8 * 1024 * 1024
    per_class = (N * D + 2 * D) * itemsize
    cb = max(1, vmem_budget // (2 * per_class))      # x2 for double buffering
    cb = min(int(cb), C)
    if C >= 2:
        cb = min(cb, pl.cdiv(C, 2))
    return max(1, cb)


def class_proto_batched(s_embs):
    """ClassProto hot path for a stack of classes.

    s_embs: (C, N, D)  ->  (C, 2*D)  per class: concat(mean first half, mean second half)
    """
    C, N, D = s_embs.shape
    cb = _choose_class_block(C, N, D, jnp.dtype(s_embs.dtype).itemsize)
    grid = (pl.cdiv(C, cb),)
    out3 = pl.pallas_call(
        class_proto_kernel,
        out_shape=jax.ShapeDtypeStruct((C, 2, D), s_embs.dtype),
        grid=grid,
        # CB sits on a leading (untiled) axis; the tiled last-two dims of each block
        # equal the full array dims, so any N/D and any partial trailing block is legal.
        in_specs=[pl.BlockSpec((cb, N, D), lambda i: (i, 0, 0))],
        out_specs=pl.BlockSpec((cb, 2, D), lambda i: (i, 0, 0)),
        compiler_params=pltpu.CompilerParams(dimension_semantics=("parallel",)),
    )(s_embs)
    # (C, 2, D) -> (C, 2*D): contiguous reshape == torch.cat((pos, neg), -1)
    return out3.reshape(C, 2 * D)


class TargetPoolPallas:
    """JAX/Pallas port of TargetPool with the default ClassProto config
    (bef_mlp=False, pos_mlp=False -> no learned parameters are instantiated)."""
    # TODO(synk): bef_mlp/pos_mlp branches need the `MLP` class, whose definition is not
    # provided in the source module; only the default (no-MLP) path is implemented.

    def __init__(self, inp_dim, hidden_dim, output_dim, num_layers,
                 bef_mlp=False, pos_mlp=False, batch_norm=False, dropout=0.0, ctx_head=1):
        assert not bef_mlp and not pos_mlp, "MLP branches not implemented (see TODO)"

    @staticmethod
    def encode_task_with_index(dataset_dict):
        index = 0
        datadict = OrderedDict(dataset_dict)
        cls_dict = {}
        for k in datadict:
            cls = datadict[k]
            for c in range(len(cls)):
                cls_dict[(k, c)] = index
                index += 1
        return cls_dict

    def __call__(self, supOfAll, dataset_dict):
        clsIndex = self.encode_task_with_index(dataset_dict)
        keys, embs = [], []
        for key in clsIndex:
            if key not in supOfAll:
                print('no key in support embeddings')
                continue
            emb = supOfAll[key]
            if isinstance(emb, dict):
                emb = emb['s_data']
            keys.append(key)
            embs.append(emb)
        if not keys:
            return {}
        stacked = jnp.stack(embs, axis=0)            # (C, N, D): all classes, one kernel launch
        codes = class_proto_batched(stacked)         # (C, 2*D)
        # Single device->host transfer; per-key (1, 2D) rows are sliced on the host to
        # avoid launching C tiny slice dispatches on the return path.
        codes_host = jax.device_get(codes)
        return {k: codes_host[i:i + 1] for i, k in enumerate(keys)}


def _class_proto_ref(s_emb):
    n_support = s_emb.shape[0]
    n_shot = n_support // 2
    pos = jnp.mean(s_emb[:n_shot], axis=0, keepdims=True)
    neg = jnp.mean(s_emb[n_shot:2 * n_shot], axis=0, keepdims=True)
    return jnp.concatenate([pos, neg], axis=-1)


if __name__ == "__main__":
    key = jax.random.PRNGKey(0)
    N_SUPPORT, FEAT_DIM = 8, 128   # D=128 keeps the stores lane-dense; kernel works for any D

    dataset_dict = OrderedDict([("dsA", [0, 1, 2]), ("dsB", [0, 1])])

    # Build support embeddings per (dataset, class) key; one entry uses the dict form.
    ks = jax.random.split(key, 5)
    supOfAll = {
        ("dsA", 0): jax.random.normal(ks[0], (N_SUPPORT, FEAT_DIM), jnp.float32),
        ("dsA", 1): {"s_data": jax.random.normal(ks[1], (N_SUPPORT, FEAT_DIM), jnp.float32)},
        ("dsA", 2): jax.random.normal(ks[2], (N_SUPPORT, FEAT_DIM), jnp.float32),
        ("dsB", 0): jax.random.normal(ks[3], (N_SUPPORT, FEAT_DIM), jnp.float32),
        ("dsB", 1): jax.random.normal(ks[4], (N_SUPPORT, FEAT_DIM), jnp.float32),
    }

    model = TargetPoolPallas(inp_dim=FEAT_DIM, hidden_dim=16, output_dim=16, num_layers=2)
    targetpool = model(supOfAll, dataset_dict)
    jax.block_until_ready(targetpool)

    # Verify against a pure-JAX reference of the PyTorch semantics.
    ok = len(targetpool) == len(supOfAll)
    for k, v in targetpool.items():
        emb = supOfAll[k]
        if isinstance(emb, dict):
            emb = emb["s_data"]
        ref = _class_proto_ref(emb)
        ok &= bool(np.allclose(np.asarray(v), np.asarray(ref), rtol=1e-5, atol=1e-5))
        ok &= (v.shape == (1, 2 * FEAT_DIM))

    if ok:
        print("KERNEL_OK")
    else:
        raise SystemExit("mismatch vs reference")
</pallas_src>

<mosaic_0001>
module attributes {stable_mosaic.version = 11 : i64} {
  func.func @class_proto_kernel(%arg0: i32, %arg1: memref<3x8x128xf32, #tpu.memory_space<vmem>>, %arg2: memref<3x2x128xf32, #tpu.memory_space<vmem>>) attributes {dimension_semantics = [#tpu.dimension_semantics<parallel>], iteration_bounds = array<i64: 2>, scalar_prefetch = 0 : i64, scratch_operands = 0 : i64, tpu.core_type = #tpu.core_type<tc>, window_params = [{transform_indices = @transform_0, window_bounds = array<i64: 3, 8, 128>}, {transform_indices = @transform_1, window_bounds = array<i64: 3, 2, 128>}]} {
    %c0 = arith.constant 0 : index
    %c0_0 = arith.constant 0 : index
    %c0_1 = arith.constant 0 : index
    %0 = vector.load %arg1[%c0, %c0_0, %c0_1] : memref<3x8x128xf32, #tpu.memory_space<vmem>>, vector<3x8x128xf32>
    %1 = vector.extract_strided_slice %0 {offsets = [0, 0, 0], sizes = [3, 4, 128], strides = [1, 1, 1]} : vector<3x8x128xf32> to vector<3x4x128xf32>
    %cst = arith.constant dense<0.000000e+00> : vector<3x128xf32>
    %2 = vector.multi_reduction <add>, %1, %cst [1] : vector<3x4x128xf32> to vector<3x128xf32>
    %cst_2 = arith.constant 2.500000e-01 : f32
    %3 = vector.broadcast %cst_2 : f32 to vector<3x128xf32>
    %4 = arith.mulf %2, %3 : vector<3x128xf32>
    %5 = vector.extract_strided_slice %0 {offsets = [0, 4, 0], sizes = [3, 4, 128], strides = [1, 1, 1]} : vector<3x8x128xf32> to vector<3x4x128xf32>
    %cst_3 = arith.constant dense<0.000000e+00> : vector<3x128xf32>
    %6 = vector.multi_reduction <add>, %5, %cst_3 [1] : vector<3x4x128xf32> to vector<3x128xf32>
    %cst_4 = arith.constant 2.500000e-01 : f32
    %7 = vector.broadcast %cst_4 : f32 to vector<3x128xf32>
    %8 = arith.mulf %6, %7 : vector<3x128xf32>
    %c0_5 = arith.constant 0 : index
    %c0_6 = arith.constant 0 : index
    %c0_7 = arith.constant 0 : index
    %9 = vector.load %arg2[%c0_5, %c0_6, %c0_7] : memref<3x2x128xf32, #tpu.memory_space<vmem>>, vector<3x1x128xf32>
    %10 = vector.shape_cast %9 : vector<3x1x128xf32> to vector<3x128xf32>
    %11 = vector.shape_cast %4 : vector<3x128xf32> to vector<3x1x128xf32>
    tpu.vector_store %arg2[%c0_5, %c0_6, %c0_7], %11 {strides = array<i32>} : memref<3x2x128xf32, #tpu.memory_space<vmem>>, vector<3x1x128xf32>,
    %c0_8 = arith.constant 0 : index
    %c1 = arith.constant 1 : index
    %c0_9 = arith.constant 0 : index
    %12 = vector.load %arg2[%c0_8, %c1, %c0_9] : memref<3x2x128xf32, #tpu.memory_space<vmem>>, vector<3x1x128xf32>
    %13 = vector.shape_cast %12 : vector<3x1x128xf32> to vector<3x128xf32>
    %14 = vector.shape_cast %8 : vector<3x128xf32> to vector<3x1x128xf32>
    tpu.vector_store %arg2[%c0_8, %c1, %c0_9], %14 {strides = array<i32>} : memref<3x2x128xf32, #tpu.memory_space<vmem>>, vector<3x1x128xf32>,
    return
  }
  func.func @transform_0(%arg0: i32) -> (i32, i32, i32) {
    %c0_i32 = arith.constant 0 : i32
    %c0_i32_0 = arith.constant 0 : i32
    %c0_i32_1 = arith.constant 0 : i32
    return %arg0, %c0_i32, %c0_i32_0 : i32, i32, i32
  }
  func.func @transform_1(%arg0: i32) -> (i32, i32, i32) {
    %c0_i32 = arith.constant 0 : i32
    %c0_i32_0 = arith.constant 0 : i32
    %c0_i32_1 = arith.constant 0 : i32
    return %arg0, %c0_i32, %c0_i32_0 : i32, i32, i32
  }
}

</mosaic_0001>

<llo_original>
// kernel: tpu_custom_call.1
$region0: #{tpu_custom_call.1}
  #allocation0 [shape = 'u32[]', space=smem, size = 0x4, offset = 0x4, fixed_abs, tag = 'smem constant byte address 0x4 - core index']
  #allocation1 [shape = 'u32[144,128]{1,0:T(1,128)}', space=vmem, size = 0x12000, scoped, tag = 'internal scratch']
  %s0 = inlined_call_operand.hbm [shape: f32[5,8,128], index: 0, kind: input, shape index: {}]
  %s1 = inlined_call_operand.hbm [shape: f32[5,2,128], index: 1, kind: output, shape index: {}]
  %s2 = sld [smem:[#allocation0]]
  $region41: #{tpu_custom_call.1} parent=0
    _
  %s4 = ssub.s32 1, %s2
  %s5 = scalar_select 0, %s4, %s2
  $region1: #{tpu_custom_call.1} parent=0
    #allocation2 [shape = 'u8[24576]{0}', space=vmem, size = 0x6000, scoped, tag = 'input window, operand 0']
    #allocation3 [shape = 's32[2]{0}', space=sflag, size = 0x8, scoped, tag = 'scoped memory for tpu_custom_call.1']
    #allocation4 [shape = 's32[2]{0}', space=sflag, size = 0x8, scoped, tag = 'scoped memory for tpu_custom_call.1']
    #allocation5 [shape = 'u8[6144]{0}', space=vmem, size = 0x1800, scoped, tag = 'output window, operand 0']
    %6 = vsyncpa [#allocation3], 0
    %s7 = scalar_lea.sflag [#allocation3], 1
    %8 = vsyncpa %s7, 0
    %9 = vsyncpa [#allocation4], 0
    %s10 = scalar_lea.sflag [#allocation4], 1
    %11 = vsyncpa %s10, 0
    loop: start=0, step=1, limit=4
    $region2: #{tpu_custom_call.1} parent=1 // loop_pre_header
      _
    $region3: #{tpu_custom_call.1} parent=1 // loop_header
      %s13 = sphi 0, %s17
      %p14 = scmp.ge.s32.totalorder %s13, 4
      %s23 = sphi 0, %s25
      %s26 = sphi 0, %s23
      %s27 = sphi 0, %s26
      %s43 = sphi 0, %s27
      %s49 = sphi 0, %s51
      %s52 = sphi 0, %s49
      %s53 = sphi 0, %s52
      %s69 = sphi 0, %s53
    $region4: #{tpu_custom_call.1} parent=1 // loop_header_branch
      %16 = sbr.rel (%p14) target = $region8
    $region5: #{tpu_custom_call.1} parent=1 // loop_body
      %s18 = ssub.s32 %s13, 1
      %s19 = ssub.s32 %s13, 2
      %s20 = sadd.s32 %s13, 1
      %s21 = ssub.s32 %s13, %s20
      %p22 = scmp.eq.s32.totalorder %s21, 0
      %s24 = sadd.s32 %s23, 1
      %s25 = scalar_select %p22, %s23, %s24
      %p28 = pneg %p22
      %p29 = scmp.eq.s32.totalorder %s13, 1
      %p30 = por %p28, %p29
      %p31 = scmp.ne.s32.totalorder %s23, %s26
      %p32 = scmp.eq.s32.totalorder %s13, 0
      %p33 = por %p31, %p32
      %p34 = scmp.ne.s32.totalorder %s23, %s26
      %p35 = scmp.eq.s32.totalorder %s18, 1
      %p36 = por %p34, %p35
      %p37 = scmp.ne.s32.totalorder %s26, %s27
      %p38 = scmp.eq.s32.totalorder %s18, 0
      %p39 = por %p37, %p38
      %p40 = scmp.ne.s32.totalorder %s26, %s27
      %p41 = scmp.eq.s32.totalorder %s19, 1
      %p42 = por %p40, %p41
      %p44 = scmp.ne.s32.totalorder %s27, %s43
      %p45 = scmp.eq.s32.totalorder %s19, 0
      %p46 = por %p44, %p45
      %s47 = ssub.s32 %s13, %s20
      %p48 = scmp.eq.s32.totalorder %s47, 0
      %s50 = sadd.s32 %s49, 1
      %s51 = scalar_select %p48, %s49, %s50
      %p54 = pneg %p48
      %p55 = scmp.eq.s32.totalorder %s13, 1
      %p56 = por %p54, %p55
      %p57 = scmp.ne.s32.totalorder %s49, %s52
      %p58 = scmp.eq.s32.totalorder %s13, 0
      %p59 = por %p57, %p58
      %p60 = scmp.ne.s32.totalorder %s49, %s52
      %p61 = scmp.eq.s32.totalorder %s18, 1
      %p62 = por %p60, %p61
      %p63 = scmp.ne.s32.totalorder %s52, %s53
      %p64 = scmp.eq.s32.totalorder %s18, 0
      %p65 = por %p63, %p64
      %p66 = scmp.ne.s32.totalorder %s52, %s53
      %p67 = scmp.eq.s32.totalorder %s19, 1
      %p68 = por %p66, %p67
      %p70 = scmp.ne.s32.totalorder %s53, %s69
      %p71 = scmp.eq.s32.totalorder %s19, 0
      %p72 = por %p70, %p71
      %p73 = scmp.le.s32.totalorder 1, %s13
      %p74 = scmp.lt.s32.totalorder %s13, 3
      %p75 = pnand %p73, %p74
      %p76 = pneg %p75
      // Predicated region
      $region9: #{tpu_custom_call.1} parent=5 // pred_check
        _
      $region10: #{tpu_custom_call.1} parent=5 // pred_check_branch
        %78 = sbr.rel (%p75) target = $region12
      $region11: #{tpu_custom_call.1} parent=5 // pred_region
        %s79 = ssub.s32 %s13, 1
      $region12: #{tpu_custom_call.1} parent=5 // pred_fallthru
        _
      %p80 = scmp.lt.s32.totalorder %s13, 2
      // Predicated region
      $region13: #{tpu_custom_call.1} parent=5 // pred_check
        %p81 = pneg %p80
      $region14: #{tpu_custom_call.1} parent=5 // pred_check_branch
        %83 = sbr.rel (%p81) target = $region16
      $region15: #{tpu_custom_call.1} parent=5 // pred_region
        // Predicated region
        $region17: #{tpu_custom_call.1} parent=15 // pred_check
          %p84 = pneg %p33
        $region18: #{tpu_custom_call.1} parent=15 // pred_check_branch
          %86 = sbr.rel (%p84) target = $region20
        $region19: #{tpu_custom_call.1} parent=15 // pred_region
          %s87 = sand.u32 %s23, 1
          %s88 = scalar_lea.sflag [#allocation3], %s87
          %s89 = sand.u32 %s23, 1
          %s90 = smul.addr %s89, 24
          %s91 = scalar_lea.vmem [#allocation2], %s90
          %s92 = smul.u32 3, %s13
          %s93 = ssub.s32 5, %s92
          %p94 = scmp.lt.s32.totalorder %s93, 3
          %s95 = scalar_select %p94, %s93, 3
          %s96 = smul.u32 128, %s95
          %s98 = ssub.s32 384, %s96
          %99 = vsyncadd %s88, %s98
          %p100 = scmp.ne.s32.totalorder 0, %s96
          %s101 = smul.addr %s92, 128
          %s102 = scalar_lea.hbm %s0, %s101
          %s103 = smul.u32 8, %s95
          %s104 = sshll.u32 %s91, 4
          %s105 = int_to_ptr.vmem [resolvable:$true] %s104
          %s106 = sshll.u32 %s103, 4
          %110 = dma.hbm_to_vmem [thread:$0]  (%p100), %s102, %s106, %s105, %s88, 128, 128, 8
        $region20: #{tpu_custom_call.1} parent=15 // pred_fallthru
          _
      $region16: #{tpu_custom_call.1} parent=5 // pred_fallthru
        _
      %p111 = scmp.le.s32.totalorder 1, %s13
      %p112 = scmp.lt.s32.totalorder %s13, 3
      %p113 = pnand %p111, %p112
      %p114 = pneg %p113
      // Predicated region
      $region21: #{tpu_custom_call.1} parent=5 // pred_check
        _
      $region22: #{tpu_custom_call.1} parent=5 // pred_check_branch
        %116 = sbr.rel (%p113) target = $region24
      $region23: #{tpu_custom_call.1} parent=5 // pred_region
        %s117 = ssub.s32 %s13, 1
        %s118 = sand.u32 %s26, 1
        %s119 = scalar_lea.sflag [#allocation3], %s118
        %s120 = sand.u32 %s26, 1
        %s121 = smul.addr %s120, 24
        %s122 = scalar_lea.vmem [#allocation2], %s121
        // Predicated region
        $region25: #{tpu_custom_call.1} parent=23 // pred_check
          %p123 = pneg %p39
        $region26: #{tpu_custom_call.1} parent=23 // pred_check_branch
          %125 = sbr.rel (%p123) target = $region28
        $region27: #{tpu_custom_call.1} parent=23 // pred_region
          %126 = dma.done %s119, 384
        $region28: #{tpu_custom_call.1} parent=23 // pred_fallthru
          _
        %s127 = sand.u32 %s26, 1
        %s128 = scalar_lea.sflag [#allocation3], %s127
        %s129 = sand.u32 %s26, 1
        %s130 = smul.addr %s129, 24
        %s131 = scalar_lea.vmem [#allocation2], %s130
        %p132 = pneg %p39
        %p133 = pneg %p36
        %p134 = pneg %p65
        %p135 = pneg %p62
        %s136 = sand.u32 %s52, 1
        %s137 = scalar_lea.sflag [#allocation4], %s136
        %s138 = sand.u32 %s52, 1
        %s139 = smul.addr %s138, 6
        %s140 = scalar_lea.vmem [#allocation5], %s139
        %s141 = smul.u32 3, %s18
        %s142 = ssub.s32 5, %s141
        %p143 = scmp.lt.s32.totalorder %s142, 3
        %s144 = scalar_select %p143, %s142, 3
        %s145 = smul.u32 128, %s144
        %s146 = smul.u32 3, %s18
        %s147 = ssub.s32 5, %s146
        %p148 = scmp.lt.s32.totalorder %s147, 3
        %s149 = scalar_select %p148, %s147, 3
        %s150 = smul.u32 32, %s149
        %v151 = vld [vmem:[%s122] sm:$0xff]
        %v152 = vld [vmem:[%s122 + $0x8] sm:$0xff]
        %v153 = vld [vmem:[%s122 + $0x10] sm:$0xff]
        %vm154 = vcmask 1043456
        %v155 = vsel %vm154, %v151, 0.0
        %v156 = vrot.slane %v155, 4
        %v157 = vadd.f32 %v155, %v156
        %v158 = vrot.slane %v157, 2
        %v159 = vadd.f32 %v157, %v158
        %v160 = vrot.slane %v159, 1
        %v161 = vadd.f32 %v159, %v160
        %v162 = vsel %vm154, %v152, 0.0
        %v163 = vrot.slane %v162, 4
        %v164 = vadd.f32 %v162, %v163
        %v165 = vrot.slane %v164, 2
        %v166 = vadd.f32 %v164, %v165
        %v167 = vrot.slane %v166, 1
        %v168 = vadd.f32 %v166, %v167
        %v169 = vsel %vm154, %v153, 0.0
        %v170 = vrot.slane %v169, 4
        %v171 = vadd.f32 %v169, %v170
        %v172 = vrot.slane %v171, 2
        %v173 = vadd.f32 %v171, %v172
        %v174 = vrot.slane %v173, 1
        %v175 = vadd.f32 %v173, %v174
        %v176 = vmul.f32 %v161, 0.25
        %v177 = vmul.f32 %v168, 0.25
        %v178 = vmul.f32 %v175, 0.25
        %v182 = vrot.slane %v151, 4
        %v183 = vrot.slane %v152, 4
        %v184 = vrot.slane %v153, 4
        %v188 = vsel %vm154, %v182, 0.0
        %v189 = vrot.slane %v188, 4
        %v190 = vadd.f32 %v188, %v189
        %v191 = vrot.slane %v190, 2
        %v192 = vadd.f32 %v190, %v191
        %v193 = vrot.slane %v192, 1
        %v194 = vadd.f32 %v192, %v193
        %v195 = vsel %vm154, %v183, 0.0
        %v196 = vrot.slane %v195, 4
        %v197 = vadd.f32 %v195, %v196
        %v198 = vrot.slane %v197, 2
        %v199 = vadd.f32 %v197, %v198
        %v200 = vrot.slane %v199, 1
        %v201 = vadd.f32 %v199, %v200
        %v202 = vsel %vm154, %v184, 0.0
        %v203 = vrot.slane %v202, 4
        %v204 = vadd.f32 %v202, %v203
        %v205 = vrot.slane %v204, 2
        %v206 = vadd.f32 %v204, %v205
        %v207 = vrot.slane %v206, 1
        %v208 = vadd.f32 %v206, %v207
        %v209 = vmul.f32 %v194, 0.25
        %v210 = vmul.f32 %v201, 0.25
        %v211 = vmul.f32 %v208, 0.25
        %212 = vst [vmem:[%s140] sm:$0x1] %v176
        %213 = vst [vmem:[%s140 + $0x2] sm:$0x1] %v177
        %214 = vst [vmem:[%s140 + $0x4] sm:$0x1] %v178
        %215 = vst [vmem:[%s140 + $0x1] sm:$0x1] %v209
        %216 = vst [vmem:[%s140 + $0x3] sm:$0x1] %v210
        %217 = vst [vmem:[%s140 + $0x5] sm:$0x1] %v211
        %s218 = sand.u32 %s52, 1
        %s219 = scalar_lea.sflag [#allocation4], %s218
        %s220 = sand.u32 %s52, 1
        %s221 = smul.addr %s220, 6
        %s222 = scalar_lea.vmem [#allocation5], %s221
        // Predicated region
        $region29: #{tpu_custom_call.1} parent=23 // pred_check
          %p223 = pneg %p62
        $region30: #{tpu_custom_call.1} parent=23 // pred_check_branch
          %225 = sbr.rel (%p223) target = $region32
        $region31: #{tpu_custom_call.1} parent=23 // pred_region
          %s226 = smul.u32 3, %s18
          %s227 = ssub.s32 5, %s226
          %p228 = scmp.lt.s32.totalorder %s227, 3
          %s229 = scalar_select %p228, %s227, 3
          %s230 = smul.u32 32, %s229
          %s232 = ssub.s32 96, %s230
          %233 = vsyncadd %s219, %s232
          %p234 = scmp.ne.s32.totalorder 0, %s230
          %s235 = smul.addr %s226, 32
          %s236 = scalar_lea.hbm %s1, %s235
          %s237 = smul.u32 2, %s229
          %s238 = sshll.u32 %s222, 4
          %s239 = int_to_ptr.vmem [resolvable:$true] %s238
          %s240 = sshll.u32 %s237, 4
          %244 = dma.vmem_to_hbm [thread:$0]  (%p234), %s239, %s240, %s236, %s219, 32, 32, 2
        $region32: #{tpu_custom_call.1} parent=23 // pred_fallthru
          _
      $region24: #{tpu_custom_call.1} parent=5 // pred_fallthru
        _
      %p245 = scmp.le.s32.totalorder 2, %s13
      // Predicated region
      $region33: #{tpu_custom_call.1} parent=5 // pred_check
        %p246 = pneg %p245
      $region34: #{tpu_custom_call.1} parent=5 // pred_check_branch
        %248 = sbr.rel (%p246) target = $region36
      $region35: #{tpu_custom_call.1} parent=5 // pred_region
        %s249 = ssub.s32 %s13, 2
        // Predicated region
        $region37: #{tpu_custom_call.1} parent=35 // pred_check
          %p250 = pneg %p68
        $region38: #{tpu_custom_call.1} parent=35 // pred_check_branch
          %252 = sbr.rel (%p250) target = $region40
        $region39: #{tpu_custom_call.1} parent=35 // pred_region
          %s253 = sand.u32 %s53, 1
          %s254 = scalar_lea.sflag [#allocation4], %s253
          %s255 = sand.u32 %s53, 1
          %s256 = smul.addr %s255, 6
          %s257 = scalar_lea.vmem [#allocation5], %s256
          %258 = dma.done %s254, 96
        $region40: #{tpu_custom_call.1} parent=35 // pred_fallthru
          _
      $region36: #{tpu_custom_call.1} parent=5 // pred_fallthru
        _
    $region6: #{tpu_custom_call.1} parent=1 // loop_footer
      %s17 = sadd.s32 1, %s13
    $region7: #{tpu_custom_call.1} parent=1 // loop_footer_branch
      %12 = sbr.rel target = $region3
    $region8: #{tpu_custom_call.1} parent=1 // loop_exit
      _
    %259 = vsyncpa [#allocation3], 1
    %s260 = scalar_lea.sflag [#allocation3], 1
    %261 = vsyncpa %s260, 1
    %262 = vsyncpa [#allocation4], 1
    %s263 = scalar_lea.sflag [#allocation4], 1
    %264 = vsyncpa %s263, 1

</llo_original>
